<compile_context>
chip_gen: v7x
topology: tpu7x:2x2x1
jax: 0.10.0
libtpu: 0.0.40
codegen_flags: <defaults>
</compile_context>

<pallas_src>
import functools
import math

import jax
import jax.numpy as jnp
from jax.experimental import pallas as pl
from jax.experimental.pallas import tpu as pltpu


# ----------------------------------------------------------------------------
# helpers
# ----------------------------------------------------------------------------
def _round_up(x, m):
    return ((x + m - 1) // m) * m


def _row_tiling(M, C):
    """Pick (padded_rows, row_tile) for [M, C] elementwise/reduction kernels (~<=2MiB/block)."""
    limit = max(8, min(1024, (2 * 1024 * 1024) // max(4 * C, 1)))
    if M <= limit:
        return M, M                      # single full-dim block (no padding needed)
    for t in (1024, 512, 256, 128, 64, 32, 16, 8):
        if t <= limit and M % t == 0:
            return M, t                  # exact tiling, no padding
    t = max(8, (min(512, limit) // 8) * 8)
    return _round_up(M, t), t            # zero-pad fallback (rare)


# ----------------------------------------------------------------------------
# Pallas kernels
# ----------------------------------------------------------------------------
def _matmul_kernel(a_ref, b_ref, o_ref, acc_ref):
    k = pl.program_id(2)

    @pl.when(k == 0)
    def _():
        acc_ref[...] = jnp.zeros_like(acc_ref)

    acc_ref[...] += jnp.dot(a_ref[...], b_ref[...],
                            preferred_element_type=jnp.float32)

    @pl.when(k == pl.num_programs(2) - 1)
    def _():
        o_ref[...] = acc_ref[...].astype(o_ref.dtype)


def _matmul_bias_kernel(a_ref, b_ref, bias_ref, o_ref, acc_ref):
    k = pl.program_id(2)

    @pl.when(k == 0)
    def _():
        acc_ref[...] = jnp.zeros_like(acc_ref)

    acc_ref[...] += jnp.dot(a_ref[...], b_ref[...],
                            preferred_element_type=jnp.float32)

    @pl.when(k == pl.num_programs(2) - 1)
    def _():
        o_ref[...] = (acc_ref[...] + bias_ref[...]).astype(o_ref.dtype)


def _bn_stats_kernel(x_ref, s_ref):
    """Accumulate per-channel sum (row 0) and sum-of-squares (row 1) into a resident (2,C)."""
    @pl.when(pl.program_id(0) == 0)
    def _():
        s_ref[...] = jnp.zeros_like(s_ref)

    x = x_ref[...].astype(jnp.float32)
    s_ref[0:1, :] += jnp.sum(x, axis=0, keepdims=True)
    s_ref[1:2, :] += jnp.sum(x * x, axis=0, keepdims=True)


def _bn_norm_kernel(x_ref, s_ref, g_ref, b_ref, o_ref, *, eps, inv_count, relu):
    x = x_ref[...].astype(jnp.float32)
    mean = s_ref[0:1, :] * inv_count
    var = s_ref[1:2, :] * inv_count - mean * mean    # biased (training-mode BN)
    scale = g_ref[...] * jax.lax.rsqrt(var + eps)
    y = (x - mean) * scale + b_ref[...]
    if relu:
        y = jnp.maximum(y, 0.0)
    o_ref[...] = y.astype(o_ref.dtype)


def _bn_add_relu_kernel(x_ref, r_ref, s_ref, g_ref, b_ref, o_ref, *, eps, inv_count):
    x = x_ref[...].astype(jnp.float32)
    mean = s_ref[0:1, :] * inv_count
    var = s_ref[1:2, :] * inv_count - mean * mean
    scale = g_ref[...] * jax.lax.rsqrt(var + eps)
    y = (x - mean) * scale + b_ref[...] + r_ref[...].astype(jnp.float32)
    o_ref[...] = jnp.maximum(y, 0.0).astype(o_ref.dtype)


def _window_max_kernel(x_ref, o_ref):
    # x: [9, tm, C] stacked shifted window views -> max over window axis
    o_ref[...] = jnp.max(x_ref[...], axis=0)


def _avgpool_kernel(x_ref, o_ref, *, inv_hw):
    # x: [1, H*W, C] -> mean over spatial axis (f32 accumulation)
    s = jnp.sum(x_ref[...].astype(jnp.float32), axis=1, keepdims=True)
    o_ref[...] = (s * inv_hw).astype(o_ref.dtype)


# ----------------------------------------------------------------------------
# Tiled matmul wrapper (traced inside the per-op jits)
# ----------------------------------------------------------------------------
def _mm(a, b2d, bias, out_dtype):
    """a: [M, K] bf16; b2d: [Kp, Np] pre-padded bf16 weight; bias: [1, Np] f32 or None."""
    M, K = a.shape
    Kp, Np = b2d.shape

    if M >= 1024:
        tm = 512
    elif M >= 256:
        tm = 256
    else:
        tm = _round_up(M, 8)
    Mp = _round_up(M, tm)

    tn = Np if Np <= 512 else 256
    if Kp <= 1024:
        tk = Kp
    else:
        tk = next((t for t in (512, 384, 256, 128) if Kp % t == 0), Kp)

    if (Mp, Kp) != (M, K):
        a = jnp.pad(a, ((0, Mp - M), (0, Kp - K)))   # fused with producing write under jit

    if bias is None:
        kernel = _matmul_kernel
        in_specs = [pl.BlockSpec((tm, tk), lambda i, j, k: (i, k)),
                    pl.BlockSpec((tk, tn), lambda i, j, k: (k, j))]
        args = (a, b2d)
    else:
        kernel = _matmul_bias_kernel
        in_specs = [pl.BlockSpec((tm, tk), lambda i, j, k: (i, k)),
                    pl.BlockSpec((tk, tn), lambda i, j, k: (k, j)),
                    pl.BlockSpec((1, tn), lambda i, j, k: (0, j))]
        args = (a, b2d, bias)

    return pl.pallas_call(
        kernel,
        out_shape=jax.ShapeDtypeStruct((Mp, Np), out_dtype),
        grid=(Mp // tm, Np // tn, Kp // tk),
        in_specs=in_specs,
        out_specs=pl.BlockSpec((tm, tn), lambda i, j, k: (i, j)),
        scratch_shapes=[pltpu.VMEM((tm, tn), jnp.float32)],
        compiler_params=pltpu.CompilerParams(
            dimension_semantics=("parallel", "parallel", "arbitrary")),
    )(*args)


# ----------------------------------------------------------------------------
# im2col glue (bf16, fused into a single materialization under the conv jit)
# ----------------------------------------------------------------------------
def _im2col(x, kh, kw, stride, pad, pad_value=0.0):
    """x: NHWC -> patches [N, Ho, Wo, kh*kw, C]."""
    N, H, W, C = x.shape
    Ho = (H + 2 * pad - kh) // stride + 1
    Wo = (W + 2 * pad - kw) // stride + 1
    if pad:
        x = jnp.pad(x, ((0, 0), (pad, pad), (pad, pad), (0, 0)),
                    constant_values=pad_value)
    cols = []
    for di in range(kh):
        for dj in range(kw):
            cols.append(x[:, di:di + stride * (Ho - 1) + 1:stride,
                          dj:dj + stride * (Wo - 1) + 1:stride, :])
    patches = jnp.stack(cols, axis=3)
    return patches, Ho, Wo


# ----------------------------------------------------------------------------
# Op wrappers (jitted per shape so repeated blocks reuse compiled kernels)
# ----------------------------------------------------------------------------
@functools.partial(jax.jit, static_argnames=("out_ch", "stride"))
def conv1x1(x, w2d, *, out_ch, stride):
    """1x1 conv specialization: no im2col, just (strided) reshape + MXU matmul."""
    if stride > 1:
        x = x[:, ::stride, ::stride, :]
    N, H, W, C = x.shape
    M = N * H * W
    out = _mm(x.reshape(M, C), w2d, None, jnp.bfloat16)
    return out[:M, :out_ch].reshape(N, H, W, out_ch)


@functools.partial(jax.jit, static_argnames=("out_ch", "kh", "kw", "stride", "pad"))
def conv2d_kxk(x, w2d, *, out_ch, kh, kw, stride, pad):
    """k x k conv via bf16 im2col + tiled MXU matmul (no bias, matches nn.Conv2d(bias=False))."""
    # TODO(synk): fusing the im2col gather into the matmul's K grid axis (shifted-view
    #             index_maps) would avoid materializing the patch tensor entirely.
    N, H, W, C = x.shape
    patches, Ho, Wo = _im2col(x, kh, kw, stride, pad)
    M = N * Ho * Wo
    out = _mm(patches.reshape(M, kh * kw * C), w2d, None, jnp.bfloat16)
    return out[:M, :out_ch].reshape(N, Ho, Wo, out_ch)


def _bn_stats(x2, tm):
    Mp, C = x2.shape
    return pl.pallas_call(
        _bn_stats_kernel,
        out_shape=jax.ShapeDtypeStruct((2, C), jnp.float32),
        grid=(Mp // tm,),
        in_specs=[pl.BlockSpec((tm, C), lambda i: (i, 0))],
        out_specs=pl.BlockSpec((2, C), lambda i: (0, 0)),
        compiler_params=pltpu.CompilerParams(dimension_semantics=("arbitrary",)),
    )(x2)


def _bn_apply(x2, res2, stats, gamma, beta, inv_count, relu, tm):
    Mp, C = x2.shape
    specs = [pl.BlockSpec((tm, C), lambda i: (i, 0))]
    args = [x2]
    if res2 is not None:
        kern = functools.partial(_bn_add_relu_kernel, eps=1e-5, inv_count=inv_count)
        specs.append(pl.BlockSpec((tm, C), lambda i: (i, 0)))
        args.append(res2)
    else:
        kern = functools.partial(_bn_norm_kernel, eps=1e-5, inv_count=inv_count, relu=relu)
    specs += [pl.BlockSpec((2, C), lambda i: (0, 0)),
              pl.BlockSpec((1, C), lambda i: (0, 0)),
              pl.BlockSpec((1, C), lambda i: (0, 0))]
    args += [stats, gamma, beta]
    return pl.pallas_call(
        kern,
        out_shape=jax.ShapeDtypeStruct((Mp, C), jnp.bfloat16),
        grid=(Mp // tm,),
        in_specs=specs,
        out_specs=pl.BlockSpec((tm, C), lambda i: (i, 0)),
        compiler_params=pltpu.CompilerParams(dimension_semantics=("parallel",)),
    )(*args)


@functools.partial(jax.jit, static_argnames=("relu",))
def batchnorm2d(x, gamma, beta, *, relu):
    """Training-mode BatchNorm2d (biased batch stats over N,H,W) + optional fused ReLU."""
    N, H, W, C = x.shape
    M = N * H * W
    x2 = x.reshape(M, C)
    Mp, tm = _row_tiling(M, C)
    if Mp != M:
        x2 = jnp.pad(x2, ((0, Mp - M), (0, 0)))   # zero rows do not perturb the sums
    stats = _bn_stats(x2, tm)
    y = _bn_apply(x2, None, stats, gamma, beta, 1.0 / M, relu, tm)
    if Mp != M:
        y = y[:M]
    return y.reshape(N, H, W, C)


@jax.jit
def batchnorm2d_add_relu(x, res, gamma, beta):
    """Fused BN (training stats) + residual add + ReLU (saves one HBM round-trip per block)."""
    N, H, W, C = x.shape
    M = N * H * W
    x2 = x.reshape(M, C)
    r2 = res.reshape(M, C)
    Mp, tm = _row_tiling(M, C)
    if Mp != M:
        x2 = jnp.pad(x2, ((0, Mp - M), (0, 0)))
        r2 = jnp.pad(r2, ((0, Mp - M), (0, 0)))
    stats = _bn_stats(x2, tm)
    y = _bn_apply(x2, r2, stats, gamma, beta, 1.0 / M, True, tm)
    if Mp != M:
        y = y[:M]
    return y.reshape(N, H, W, C)


@jax.jit
def maxpool_3x3_s2_p1(x):
    # Input comes from BN+ReLU (non-negative), so zero padding == -inf padding here.
    N, H, W, C = x.shape
    patches, Ho, Wo = _im2col(x, 3, 3, 2, 1, pad_value=0.0)
    M = N * Ho * Wo
    stacked = jnp.transpose(patches.reshape(M, 9, C), (1, 0, 2))   # [9, M, C]
    Mp, tm = _row_tiling(M, C)
    if Mp != M:
        stacked = jnp.pad(stacked, ((0, 0), (0, Mp - M), (0, 0)))
    out = pl.pallas_call(
        _window_max_kernel,
        out_shape=jax.ShapeDtypeStruct((Mp, C), x.dtype),
        grid=(Mp // tm,),
        in_specs=[pl.BlockSpec((9, tm, C), lambda i: (0, i, 0))],
        out_specs=pl.BlockSpec((tm, C), lambda i: (i, 0)),
        compiler_params=pltpu.CompilerParams(dimension_semantics=("parallel",)),
    )(stacked)
    if Mp != M:
        out = out[:M]
    return out.reshape(N, Ho, Wo, C)


@functools.partial(jax.jit, static_argnames=("num_classes",))
def avgpool_fc(x, fc_w2d, fc_b, *, num_classes):
    """AdaptiveAvgPool2d((1,1)) + flatten + Linear (bias fused into the matmul epilogue)."""
    N, H, W, C = x.shape
    pooled = pl.pallas_call(
        functools.partial(_avgpool_kernel, inv_hw=1.0 / (H * W)),
        out_shape=jax.ShapeDtypeStruct((N, 1, C), jnp.bfloat16),
        grid=(N,),
        in_specs=[pl.BlockSpec((1, H * W, C), lambda i: (i, 0, 0))],
        out_specs=pl.BlockSpec((1, 1, C), lambda i: (i, 0, 0)),
        compiler_params=pltpu.CompilerParams(dimension_semantics=("parallel",)),
    )(x.reshape(N, H * W, C))
    out = _mm(pooled.reshape(N, C), fc_w2d, fc_b, jnp.float32)
    return out[:N, :num_classes]


# ----------------------------------------------------------------------------
# Parameter construction (deterministic, mirrors the PyTorch __init__)
# ----------------------------------------------------------------------------
def _kaiming_fanout(key, shape):
    # nn.init.kaiming_normal_(mode='fan_out', nonlinearity='relu') on OIHW conv weight
    O, _, kh, kw = shape
    std = math.sqrt(2.0 / (O * kh * kw))
    return jax.random.normal(key, shape, jnp.float32) * std


def _conv_w2d(w_oihw):
    """OIHW conv weight -> pre-transposed, 128-aligned (Kp, Op) bf16 matmul operand."""
    O, I, kh, kw = w_oihw.shape
    K = kh * kw * I
    w2d = jnp.transpose(w_oihw, (2, 3, 1, 0)).reshape(K, O)
    Kp, Np = _round_up(K, 128), _round_up(O, 128)
    if (Kp, Np) != (K, O):
        w2d = jnp.pad(w2d, ((0, Kp - K), (0, Np - O)))
    return w2d.astype(jnp.bfloat16)


def _make_bottleneck_params(key, in_c, width, stride, has_ds):
    ks = jax.random.split(key, 4)
    p = {
        "stride": stride,
        "has_ds": has_ds,
        "width": width,
        "conv1_w": _conv_w2d(_kaiming_fanout(ks[0], (width, in_c, 1, 1))),
        "bn1_g": jnp.ones((1, width), jnp.float32),
        "bn1_b": jnp.zeros((1, width), jnp.float32),
        "conv2_w": _conv_w2d(_kaiming_fanout(ks[1], (width, width, 3, 3))),
        "bn2_g": jnp.ones((1, width), jnp.float32),
        "bn2_b": jnp.zeros((1, width), jnp.float32),
        "conv3_w": _conv_w2d(_kaiming_fanout(ks[2], (width * 4, width, 1, 1))),
        "bn3_g": jnp.ones((1, width * 4), jnp.float32),
        "bn3_b": jnp.zeros((1, width * 4), jnp.float32),
    }
    if has_ds:
        p["ds_conv_w"] = _conv_w2d(_kaiming_fanout(ks[3], (width * 4, in_c, 1, 1)))
        p["ds_bn_g"] = jnp.ones((1, width * 4), jnp.float32)
        p["ds_bn_b"] = jnp.zeros((1, width * 4), jnp.float32)
    return p


def build_resnet50_params(key, num_classes=1000, blocks_num=(3, 4, 6, 3)):
    expansion = 4
    keys = jax.random.split(key, 8)
    params = {
        "conv1_w": _conv_w2d(_kaiming_fanout(keys[0], (64, 3, 7, 7))),
        "bn1_g": jnp.ones((1, 64), jnp.float32),
        "bn1_b": jnp.zeros((1, 64), jnp.float32),
    }
    in_c = 64
    layer_channels = (64, 128, 256, 512)
    layer_strides = (1, 2, 2, 2)
    for li, (ch, st, nb) in enumerate(zip(layer_channels, layer_strides, blocks_num)):
        blocks = []
        bkeys = jax.random.split(keys[1 + li], nb)
        for bi in range(nb):
            stride = st if bi == 0 else 1
            has_ds = bi == 0 and (stride != 1 or in_c != ch * expansion)
            blocks.append(_make_bottleneck_params(bkeys[bi], in_c, ch, stride, has_ds))
            in_c = ch * expansion
        params[f"layer{li + 1}"] = blocks
    # nn.Linear default init: U(-1/sqrt(fan_in), 1/sqrt(fan_in)); stored pre-transposed/padded.
    fan_in = 512 * expansion
    bound = 1.0 / math.sqrt(fan_in)
    kw_, kb = jax.random.split(keys[5])
    fc_w = jax.random.uniform(kw_, (num_classes, fan_in), jnp.float32,
                              minval=-bound, maxval=bound)
    fc_b = jax.random.uniform(kb, (num_classes,), jnp.float32,
                              minval=-bound, maxval=bound)
    n_pad = _round_up(num_classes, 128)
    params["fc_w"] = jnp.zeros((fan_in, n_pad), jnp.float32).at[:, :num_classes].set(
        fc_w.T).astype(jnp.bfloat16)
    params["fc_b"] = jnp.zeros((1, n_pad), jnp.float32).at[0, :num_classes].set(fc_b)
    params["num_classes"] = num_classes
    return params


# ----------------------------------------------------------------------------
# Forward pass
# ----------------------------------------------------------------------------
def _bottleneck_forward(x, p):
    out = conv1x1(x, p["conv1_w"], out_ch=p["width"], stride=1)
    out = batchnorm2d(out, p["bn1_g"], p["bn1_b"], relu=True)
    out = conv2d_kxk(out, p["conv2_w"], out_ch=p["width"], kh=3, kw=3,
                     stride=p["stride"], pad=1)
    out = batchnorm2d(out, p["bn2_g"], p["bn2_b"], relu=True)
    out = conv1x1(out, p["conv3_w"], out_ch=p["width"] * 4, stride=1)
    if p["has_ds"]:
        identity = conv1x1(x, p["ds_conv_w"], out_ch=p["width"] * 4, stride=p["stride"])
        identity = batchnorm2d(identity, p["ds_bn_g"], p["ds_bn_b"], relu=False)
    else:
        identity = x
    # bn3 + residual add + ReLU fused into one tiled kernel
    return batchnorm2d_add_relu(out, identity, p["bn3_g"], p["bn3_b"])


def resnet50_forward(params, x_nchw, include_top=True):
    # layout: NCHW input (PyTorch convention) -> NHWC bf16 for all kernels.
    x = jnp.transpose(x_nchw, (0, 2, 3, 1)).astype(jnp.bfloat16)
    x = conv2d_kxk(x, params["conv1_w"], out_ch=64, kh=7, kw=7, stride=2, pad=3)
    x = batchnorm2d(x, params["bn1_g"], params["bn1_b"], relu=True)
    x = maxpool_3x3_s2_p1(x)
    for layer_name in ("layer1", "layer2", "layer3", "layer4"):
        for bp in params[layer_name]:
            x = _bottleneck_forward(x, bp)
    if include_top:
        x = avgpool_fc(x, params["fc_w"], params["fc_b"],
                       num_classes=params["num_classes"])
    return x


# ----------------------------------------------------------------------------
# Main
# ----------------------------------------------------------------------------
if __name__ == "__main__":
    key = jax.random.PRNGKey(0)
    pkey, xkey = jax.random.split(key)
    params = build_resnet50_params(pkey, num_classes=1000, blocks_num=(3, 4, 6, 3))
    # Small-but-consistent input: ResNet conv1 requires 3 input channels.
    x = jax.random.normal(xkey, (2, 3, 32, 32), jnp.float32)  # NCHW, like PyTorch

    out = resnet50_forward(params, x)
    out = jax.block_until_ready(out)
    assert out.shape == (2, 1000), out.shape
    assert bool(jnp.all(jnp.isfinite(out)))
    print("KERNEL_OK")
</pallas_src>

<mosaic_0001>
module attributes {stable_mosaic.version = 11 : i64} {
  func.func @_matmul_kernel(%arg0: i32, %arg1: i32, %arg2: i32, %arg3: memref<256x256xbf16, #tpu.memory_space<vmem>>, %arg4: memref<256x128xbf16, #tpu.memory_space<vmem>>, %arg5: memref<256x128xbf16, #tpu.memory_space<vmem>>, %arg6: memref<256x128xf32, #tpu.memory_space<vmem>>) attributes {dimension_semantics = [#tpu.dimension_semantics<parallel>, #tpu.dimension_semantics<parallel>, #tpu.dimension_semantics<arbitrary>], iteration_bounds = array<i64: 2, 1, 1>, scalar_prefetch = 0 : i64, scratch_operands = 1 : i64, tpu.core_type = #tpu.core_type<tc>, window_params = [{transform_indices = @transform_0, window_bounds = array<i64: 256, 256>}, {transform_indices = @transform_1, window_bounds = array<i64: 256, 128>}, {transform_indices = @transform_2, window_bounds = array<i64: 256, 128>}]} {
    %c0_i32 = arith.constant 0 : i32
    %0 = arith.cmpi eq, %arg2, %c0_i32 : i32
    %1 = arith.extui %0 : i1 to i32
    %c0_i32_0 = arith.constant 0 : i32
    %2 = arith.cmpi ne, %1, %c0_i32_0 : i32
    scf.if %2 {
      %cst_10 = arith.constant 0.000000e+00 : f32
      %12 = vector.broadcast %cst_10 : f32 to vector<256x128xf32>
      %c0_11 = arith.constant 0 : index
      %c0_12 = arith.constant 0 : index
      %13 = vector.load %arg6[%c0_11, %c0_12] : memref<256x128xf32, #tpu.memory_space<vmem>>, vector<256x128xf32>
      tpu.vector_store %arg6[%c0_11, %c0_12], %12 {strides = array<i32>} : memref<256x128xf32, #tpu.memory_space<vmem>>, vector<256x128xf32>,
    } else {
    }
    %c0 = arith.constant 0 : index
    %c0_1 = arith.constant 0 : index
    %3 = vector.load %arg6[%c0, %c0_1] : memref<256x128xf32, #tpu.memory_space<vmem>>, vector<256x128xf32>
    %c0_2 = arith.constant 0 : index
    %c0_3 = arith.constant 0 : index
    %4 = vector.load %arg3[%c0_2, %c0_3] : memref<256x256xbf16, #tpu.memory_space<vmem>>, vector<256x256xbf16>
    %c0_4 = arith.constant 0 : index
    %c0_5 = arith.constant 0 : index
    %5 = vector.load %arg4[%c0_4, %c0_5] : memref<256x128xbf16, #tpu.memory_space<vmem>>, vector<256x128xbf16>
    %cst = arith.constant dense<0.000000e+00> : vector<256x128xf32>
    %6 = tpu.matmul %4, %5, %cst {dimension_numbers = #tpu.dot_dimension_numbers<[1], [0], [0], [1], [0, 0, 1, 1], [], []>} : vector<256x256xbf16>, vector<256x128xbf16>, vector<256x128xf32> -> vector<256x128xf32>
    %7 = arith.addf %3, %6 : vector<256x128xf32>
    %c0_6 = arith.constant 0 : index
    %c0_7 = arith.constant 0 : index
    %8 = vector.load %arg6[%c0_6, %c0_7] : memref<256x128xf32, #tpu.memory_space<vmem>>, vector<256x128xf32>
    tpu.vector_store %arg6[%c0_6, %c0_7], %7 {strides = array<i32>} : memref<256x128xf32, #tpu.memory_space<vmem>>, vector<256x128xf32>,
    %c0_i32_8 = arith.constant 0 : i32
    %9 = arith.cmpi eq, %arg2, %c0_i32_8 : i32
    %10 = arith.extui %9 : i1 to i32
    %c0_i32_9 = arith.constant 0 : i32
    %11 = arith.cmpi ne, %10, %c0_i32_9 : i32
    scf.if %11 {
      %c0_10 = arith.constant 0 : index
      %c0_11 = arith.constant 0 : index
      %12 = vector.load %arg6[%c0_10, %c0_11] : memref<256x128xf32, #tpu.memory_space<vmem>>, vector<256x128xf32>
      %13 = arith.truncf %12 : vector<256x128xf32> to vector<256x128xbf16>
      %c0_12 = arith.constant 0 : index
      %c0_13 = arith.constant 0 : index
      %14 = vector.load %arg5[%c0_12, %c0_13] : memref<256x128xbf16, #tpu.memory_space<vmem>>, vector<256x128xbf16>
      tpu.vector_store %arg5[%c0_12, %c0_13], %13 {strides = array<i32>} : memref<256x128xbf16, #tpu.memory_space<vmem>>, vector<256x128xbf16>,
    } else {
    }
    return
  }
  func.func @transform_0(%arg0: i32, %arg1: i32, %arg2: i32) -> (i32, i32) {
    %c0_i32 = arith.constant 0 : i32
    return %arg0, %arg2 : i32, i32
  }
  func.func @transform_1(%arg0: i32, %arg1: i32, %arg2: i32) -> (i32, i32) {
    %c0_i32 = arith.constant 0 : i32
    return %arg2, %arg1 : i32, i32
  }
  func.func @transform_2(%arg0: i32, %arg1: i32, %arg2: i32) -> (i32, i32) {
    %c0_i32 = arith.constant 0 : i32
    return %arg0, %arg1 : i32, i32
  }
}

</mosaic_0001>

<llo_original>
// kernel: conv2d_kxk.1
$region0: #{conv2d_kxk.1}
  #allocation0 [shape = 'u32[]', space=smem, size = 0x4, offset = 0x4, fixed_abs, tag = 'smem constant byte address 0x4 - core index']
  #allocation1 [shape = 'u32[144,128]{1,0:T(1,128)}', space=vmem, size = 0x12000, scoped, tag = 'internal scratch']
  #allocation2 [shape = 'f32[256,128]{1,0:T(8,128)}', space=vmem, size = 0x20000, scoped, tag = 'scratch operand']
  %s0 = inlined_call_operand.vmem [shape: bf16[512,256], index: 0, kind: input, shape index: {}]
  %s1 = inlined_call_operand.vmem [shape: bf16[256,128], index: 1, kind: input, shape index: {}]
  %s2 = inlined_call_operand.hbm [shape: bf16[512,128], index: 2, kind: output, shape index: {}]
  %s3 = sld [smem:[#allocation0]]
  $region49: #{conv2d_kxk.1} parent=0
    _
  %s5 = ssub.s32 1, %s3
  %s6 = scalar_select 0, %s5, %s3
  $region1: #{conv2d_kxk.1} parent=0
    #allocation3 [shape = 'u8[131072]{0}', space=vmem, size = 0x20000, scoped, tag = 'output window, operand 0']
    #allocation4 [shape = 's32[2]{0}', space=sflag, size = 0x8, scoped, tag = 'scoped memory for conv2d_kxk.1']
    %7 = vsyncpa [#allocation4], 0
    %s8 = scalar_lea.sflag [#allocation4], 1
    %9 = vsyncpa %s8, 0
    loop: start=0, step=1, limit=4
    $region2: #{conv2d_kxk.1} parent=1 // loop_pre_header
      _
    $region3: #{conv2d_kxk.1} parent=1 // loop_header
      %s11 = sphi 0, %s15
      %p12 = scmp.ge.s32.totalorder %s11, 4
      %s18 = sphi 0, %s37
      %s19 = sphi 0, %s33
      %s20 = sphi 0, %s29
      %s21 = sphi 0, %s18
      %s22 = sphi 0, %s19
      %s23 = sphi 0, %s20
      %s24 = sphi 0, %s21
      %s25 = sphi 0, %s22
      %s26 = sphi 0, %s23
      %s42 = sphi 0, %s44
      %s45 = sphi 0, %s42
      %s46 = sphi 0, %s45
      %s62 = sphi 0, %s46
      %s70 = sphi 0, %s72
      %s73 = sphi 0, %s70
      %s74 = sphi 0, %s73
      %s90 = sphi 0, %s74
      %s98 = sphi 0, %s100
      %s101 = sphi 0, %s98
      %s102 = sphi 0, %s101
      %s118 = sphi 0, %s102
    $region4: #{conv2d_kxk.1} parent=1 // loop_header_branch
      %14 = sbr.rel (%p12) target = $region8
    $region5: #{conv2d_kxk.1} parent=1 // loop_body
      %s16 = ssub.s32 %s11, 1
      %s17 = ssub.s32 %s11, 2
      %s27 = sadd.s32 1, %s20
      %p28 = scmp.ge.s32.totalorder %s27, 1
      %s29 = scalar_select %p28, 0, %s27
      %s30 = sadd.s32 1, %s19
      %s31 = scalar_select %p28, %s30, %s19
      %p32 = scmp.ge.s32.totalorder %s31, 1
      %s33 = scalar_select %p32, 0, %s31
      %s34 = sadd.s32 1, %s18
      %s35 = scalar_select %p32, %s34, %s18
      %p36 = scmp.ge.s32.totalorder %s35, 2
      %s37 = scalar_select %p36, 0, %s35
      %s38 = ssub.s32 %s18, %s37
      %s39 = ssub.s32 %s20, %s29
      %s40 = sor.u32 %s38, %s39
      %p41 = scmp.eq.s32.totalorder %s40, 0
      %s43 = sadd.s32 %s42, 1
      %s44 = scalar_select %p41, %s42, %s43
      %p47 = pneg %p41
      %p48 = scmp.eq.s32.totalorder %s11, 1
      %p49 = por %p47, %p48
      %p50 = scmp.ne.s32.totalorder %s42, %s45
      %p51 = scmp.eq.s32.totalorder %s11, 0
      %p52 = por %p50, %p51
      %p53 = scmp.ne.s32.totalorder %s42, %s45
      %p54 = scmp.eq.s32.totalorder %s16, 1
      %p55 = por %p53, %p54
      %p56 = scmp.ne.s32.totalorder %s45, %s46
      %p57 = scmp.eq.s32.totalorder %s16, 0
      %p58 = por %p56, %p57
      %p59 = scmp.ne.s32.totalorder %s45, %s46
      %p60 = scmp.eq.s32.totalorder %s17, 1
      %p61 = por %p59, %p60
      %p63 = scmp.ne.s32.totalorder %s46, %s62
      %p64 = scmp.eq.s32.totalorder %s17, 0
      %p65 = por %p63, %p64
      %s66 = ssub.s32 %s20, %s29
      %s67 = ssub.s32 %s19, %s33
      %s68 = sor.u32 %s66, %s67
      %p69 = scmp.eq.s32.totalorder %s68, 0
      %s71 = sadd.s32 %s70, 1
      %s72 = scalar_select %p69, %s70, %s71
      %p75 = pneg %p69
      %p76 = scmp.eq.s32.totalorder %s11, 1
      %p77 = por %p75, %p76
      %p78 = scmp.ne.s32.totalorder %s70, %s73
      %p79 = scmp.eq.s32.totalorder %s11, 0
      %p80 = por %p78, %p79
      %p81 = scmp.ne.s32.totalorder %s70, %s73
      %p82 = scmp.eq.s32.totalorder %s16, 1
      %p83 = por %p81, %p82
      %p84 = scmp.ne.s32.totalorder %s73, %s74
      %p85 = scmp.eq.s32.totalorder %s16, 0
      %p86 = por %p84, %p85
      %p87 = scmp.ne.s32.totalorder %s73, %s74
      %p88 = scmp.eq.s32.totalorder %s17, 1
      %p89 = por %p87, %p88
      %p91 = scmp.ne.s32.totalorder %s74, %s90
      %p92 = scmp.eq.s32.totalorder %s17, 0
      %p93 = por %p91, %p92
      %s94 = ssub.s32 %s18, %s37
      %s95 = ssub.s32 %s19, %s33
      %s96 = sor.u32 %s94, %s95
      %p97 = scmp.eq.s32.totalorder %s96, 0
      %s99 = sadd.s32 %s98, 1
      %s100 = scalar_select %p97, %s98, %s99
      %p103 = pneg %p97
      %p104 = scmp.eq.s32.totalorder %s11, 1
      %p105 = por %p103, %p104
      %p106 = scmp.ne.s32.totalorder %s98, %s101
      %p107 = scmp.eq.s32.totalorder %s11, 0
      %p108 = por %p106, %p107
      %p109 = scmp.ne.s32.totalorder %s98, %s101
      %p110 = scmp.eq.s32.totalorder %s16, 1
      %p111 = por %p109, %p110
      %p112 = scmp.ne.s32.totalorder %s101, %s102
      %p113 = scmp.eq.s32.totalorder %s16, 0
      %p114 = por %p112, %p113
      %p115 = scmp.ne.s32.totalorder %s101, %s102
      %p116 = scmp.eq.s32.totalorder %s17, 1
      %p117 = por %p115, %p116
      %p119 = scmp.ne.s32.totalorder %s102, %s118
      %p120 = scmp.eq.s32.totalorder %s17, 0
      %p121 = por %p119, %p120
      %p122 = scmp.le.s32.totalorder 1, %s11
      %p123 = scmp.lt.s32.totalorder %s11, 3
      %p124 = pnand %p122, %p123
      %p125 = pneg %p124
      // Predicated region
      $region9: #{conv2d_kxk.1} parent=5 // pred_check
        _
      $region10: #{conv2d_kxk.1} parent=5 // pred_check_branch
        %127 = sbr.rel (%p124) target = $region12
      $region11: #{conv2d_kxk.1} parent=5 // pred_region
        %s128 = ssub.s32 %s11, 1
        // Predicated region
        $region13: #{conv2d_kxk.1} parent=11 // pred_check
          %p129 = pneg %p86
        $region14: #{conv2d_kxk.1} parent=11 // pred_check_branch
          %131 = sbr.rel (%p129) target = $region16
        $region15: #{conv2d_kxk.1} parent=11 // pred_region
          %s132 = smul.u32 32, %s23
          %p133 = scmp.lt.s32.totalorder %s132, 31
          %s134 = scalar_select %p133, %s132, 31
          %p135 = scmp.lt.s32.totalorder %s22, 0
          %s136 = scalar_select %p135, %s22, 0
          %s137 = sadd.s32 %s136, %s134
          %s138 = smul.addr %s137, 4
          %s139 = scalar_lea.vmem %s1, %s138
          %s140 = smul.u32 32, %s23
        $region16: #{conv2d_kxk.1} parent=11 // pred_fallthru
          _
      $region12: #{conv2d_kxk.1} parent=5 // pred_fallthru
        _
      %p141 = scmp.lt.s32.totalorder %s11, 2
      // Predicated region
      $region17: #{conv2d_kxk.1} parent=5 // pred_check
        %p142 = pneg %p141
      $region18: #{conv2d_kxk.1} parent=5 // pred_check_branch
        %144 = sbr.rel (%p142) target = $region20
      $region19: #{conv2d_kxk.1} parent=5 // pred_region
        // Predicated region
        $region21: #{conv2d_kxk.1} parent=19 // pred_check
          %p145 = pneg %p52
        $region22: #{conv2d_kxk.1} parent=19 // pred_check_branch
          %147 = sbr.rel (%p145) target = $region24
        $region23: #{conv2d_kxk.1} parent=19 // pred_region
          %s148 = smul.u32 32, %s18
          %s149 = smul.u32 2, %s20
          %p150 = scmp.lt.s32.totalorder %s148, 63
          %s151 = scalar_select %p150, %s148, 63
          %p152 = scmp.lt.s32.totalorder %s149, 1
          %s153 = scalar_select %p152, %s149, 1
          %s154 = smul.addr %s151, 2
          %s155 = sadd.s32 %s153, %s154
          %s156 = smul.addr %s155, 4
          %s157 = scalar_lea.vmem %s0, %s156
          %s158 = smul.u32 32, %s18
          %s159 = smul.u32 2, %s20
        $region24: #{conv2d_kxk.1} parent=19 // pred_fallthru
          _
      $region20: #{conv2d_kxk.1} parent=5 // pred_fallthru
        _
      %p160 = scmp.le.s32.totalorder 1, %s11
      %p161 = scmp.lt.s32.totalorder %s11, 3
      %p162 = pnand %p160, %p161
      %p163 = pneg %p162
      // Predicated region
      $region25: #{conv2d_kxk.1} parent=5 // pred_check
        _
      $region26: #{conv2d_kxk.1} parent=5 // pred_check_branch
        %165 = sbr.rel (%p162) target = $region28
      $region27: #{conv2d_kxk.1} parent=5 // pred_region
        %s166 = ssub.s32 %s11, 1
        %s167 = smul.u32 32, %s21
        %s168 = smul.u32 2, %s23
        %p169 = scmp.lt.s32.totalorder %s167, 63
        %s170 = scalar_select %p169, %s167, 63
        %p171 = scmp.lt.s32.totalorder %s168, 1
        %s172 = scalar_select %p171, %s168, 1
        %s173 = smul.addr %s170, 2
        %s174 = sadd.s32 %s172, %s173
        %s175 = smul.addr %s174, 4
        %s176 = scalar_lea.vmem %s0, %s175
        %p177 = pneg %p58
        %p178 = pneg %p55
        %s179 = smul.u32 32, %s23
        %p180 = scmp.lt.s32.totalorder %s179, 31
        %s181 = scalar_select %p180, %s179, 31
        %p182 = scmp.lt.s32.totalorder %s22, 0
        %s183 = scalar_select %p182, %s22, 0
        %s184 = sadd.s32 %s183, %s181
        %s185 = smul.addr %s184, 4
        %s186 = scalar_lea.vmem %s1, %s185
        %p187 = pneg %p86
        %p188 = pneg %p83
        %p189 = pneg %p114
        %p190 = pneg %p111
        %s191 = sand.u32 %s101, 1
        %s192 = scalar_lea.sflag [#allocation4], %s191
        %s193 = sand.u32 %s101, 1
        %s194 = smul.addr %s193, 128
        %s195 = scalar_lea.vmem [#allocation3], %s194
        %s196 = smul.u32 32, %s21
        %s197 = smul.u32 2, %s23
        %p198 = scmp.lt.s32.totalorder %s196, 63
        %s199 = scalar_select %p198, %s196, 63
        %p200 = scmp.lt.s32.totalorder %s197, 1
        %s201 = scalar_select %p200, %s197, 1
        %s202 = smul.addr %s199, 2
        %s203 = sadd.s32 %s201, %s202
        %s204 = smul.addr %s203, 4
        %s205 = scalar_lea.vmem %s0, %s204
        %s206 = smul.u32 32, %s21
        %s207 = smul.u32 2, %s23
        %s208 = smul.u32 32, %s23
        %p209 = scmp.lt.s32.totalorder %s208, 31
        %s210 = scalar_select %p209, %s208, 31
        %p211 = scmp.lt.s32.totalorder %s22, 0
        %s212 = scalar_select %p211, %s22, 0
        %s213 = sadd.s32 %s212, %s210
        %s214 = smul.addr %s213, 4
        %s215 = scalar_lea.vmem %s1, %s214
        %s216 = smul.u32 32, %s23
        %s217 = smul.u32 32, %s21
        %p219 = scmp.eq.s32.totalorder %s23, 0
        // Predicated region
        $region29: #{conv2d_kxk.1} parent=27 // pred_check
          %p220 = pneg %p219
        $region30: #{conv2d_kxk.1} parent=27 // pred_check_branch
          %222 = sbr.rel (%p220) target = $region32
        $region31: #{conv2d_kxk.1} parent=27 // pred_region
          %223 = vst [vmem:[#allocation2] sm:$0xff] 0.0
          %224 = vst [vmem:[#allocation2 + $0x8] sm:$0xff] 0.0
          %225 = vst [vmem:[#allocation2 + $0x10] sm:$0xff] 0.0
          %226 = vst [vmem:[#allocation2 + $0x18] sm:$0xff] 0.0
          %227 = vst [vmem:[#allocation2 + $0x20] sm:$0xff] 0.0
          %228 = vst [vmem:[#allocation2 + $0x28] sm:$0xff] 0.0
          %229 = vst [vmem:[#allocation2 + $0x30] sm:$0xff] 0.0
          %230 = vst [vmem:[#allocation2 + $0x38] sm:$0xff] 0.0
          %231 = vst [vmem:[#allocation2 + $0x40] sm:$0xff] 0.0
          %232 = vst [vmem:[#allocation2 + $0x48] sm:$0xff] 0.0
          %233 = vst [vmem:[#allocation2 + $0x50] sm:$0xff] 0.0
          %234 = vst [vmem:[#allocation2 + $0x58] sm:$0xff] 0.0
          %235 = vst [vmem:[#allocation2 + $0x60] sm:$0xff] 0.0
          %236 = vst [vmem:[#allocation2 + $0x68] sm:$0xff] 0.0
          %237 = vst [vmem:[#allocation2 + $0x70] sm:$0xff] 0.0
          %238 = vst [vmem:[#allocation2 + $0x78] sm:$0xff] 0.0
          %239 = vst [vmem:[#allocation2 + $0x80] sm:$0xff] 0.0
          %240 = vst [vmem:[#allocation2 + $0x88] sm:$0xff] 0.0
          %241 = vst [vmem:[#allocation2 + $0x90] sm:$0xff] 0.0
          %242 = vst [vmem:[#allocation2 + $0x98] sm:$0xff] 0.0
          %243 = vst [vmem:[#allocation2 + $0xa0] sm:$0xff] 0.0
          %244 = vst [vmem:[#allocation2 + $0xa8] sm:$0xff] 0.0
          %245 = vst [vmem:[#allocation2 + $0xb0] sm:$0xff] 0.0
          %246 = vst [vmem:[#allocation2 + $0xb8] sm:$0xff] 0.0
          %247 = vst [vmem:[#allocation2 + $0xc0] sm:$0xff] 0.0
          %248 = vst [vmem:[#allocation2 + $0xc8] sm:$0xff] 0.0
          %249 = vst [vmem:[#allocation2 + $0xd0] sm:$0xff] 0.0
          %250 = vst [vmem:[#allocation2 + $0xd8] sm:$0xff] 0.0
          %251 = vst [vmem:[#allocation2 + $0xe0] sm:$0xff] 0.0
          %252 = vst [vmem:[#allocation2 + $0xe8] sm:$0xff] 0.0
          %253 = vst [vmem:[#allocation2 + $0xf0] sm:$0xff] 0.0
          %254 = vst [vmem:[#allocation2 + $0xf8] sm:$0xff] 0.0
        $region32: #{conv2d_kxk.1} parent=27 // pred_fallthru
          _
        %v255 = vld [vmem:[#allocation2] sm:$0xff]
        %v256 = vld [vmem:[#allocation2 + $0x8] sm:$0xff]
        %v257 = vld [vmem:[#allocation2 + $0x10] sm:$0xff]
        %v258 = vld [vmem:[#allocation2 + $0x18] sm:$0xff]
        %v259 = vld [vmem:[#allocation2 + $0x20] sm:$0xff]
        %v260 = vld [vmem:[#allocation2 + $0x28] sm:$0xff]
        %v261 = vld [vmem:[#allocation2 + $0x30] sm:$0xff]
        %v262 = vld [vmem:[#allocation2 + $0x38] sm:$0xff]
        %v263 = vld [vmem:[#allocation2 + $0x40] sm:$0xff]
        %v264 = vld [vmem:[#allocation2 + $0x48] sm:$0xff]
        %v265 = vld [vmem:[#allocation2 + $0x50] sm:$0xff]
        %v266 = vld [vmem:[#allocation2 + $0x58] sm:$0xff]
        %v267 = vld [vmem:[#allocation2 + $0x60] sm:$0xff]
        %v268 = vld [vmem:[#allocation2 + $0x68] sm:$0xff]
        %v269 = vld [vmem:[#allocation2 + $0x70] sm:$0xff]
        %v270 = vld [vmem:[#allocation2 + $0x78] sm:$0xff]
        %v271 = vld [vmem:[#allocation2 + $0x80] sm:$0xff]
        %v272 = vld [vmem:[#allocation2 + $0x88] sm:$0xff]
        %v273 = vld [vmem:[#allocation2 + $0x90] sm:$0xff]
        %v274 = vld [vmem:[#allocation2 + $0x98] sm:$0xff]
        %v275 = vld [vmem:[#allocation2 + $0xa0] sm:$0xff]
        %v276 = vld [vmem:[#allocation2 + $0xa8] sm:$0xff]
        %v277 = vld [vmem:[#allocation2 + $0xb0] sm:$0xff]
        %v278 = vld [vmem:[#allocation2 + $0xb8] sm:$0xff]
        %v279 = vld [vmem:[#allocation2 + $0xc0] sm:$0xff]
        %v280 = vld [vmem:[#allocation2 + $0xc8] sm:$0xff]
        %v281 = vld [vmem:[#allocation2 + $0xd0] sm:$0xff]
        %v282 = vld [vmem:[#allocation2 + $0xd8] sm:$0xff]
        %v283 = vld [vmem:[#allocation2 + $0xe0] sm:$0xff]
        %v284 = vld [vmem:[#allocation2 + $0xe8] sm:$0xff]
        %v285 = vld [vmem:[#allocation2 + $0xf0] sm:$0xff]
        %v286 = vld [vmem:[#allocation2 + $0xf8] sm:$0xff]
        %v287 = vld [vmem:[%s205] sm:$0xff]
        %v288 = vld [vmem:[%s205 + $0x8] sm:$0xff]
        %v289 = vld [vmem:[%s205 + $0x10] sm:$0xff]
        %v290 = vld [vmem:[%s205 + $0x18] sm:$0xff]
        %v291 = vld [vmem:[%s205 + $0x20] sm:$0xff]
        %v292 = vld [vmem:[%s205 + $0x28] sm:$0xff]
        %v293 = vld [vmem:[%s205 + $0x30] sm:$0xff]
        %v294 = vld [vmem:[%s205 + $0x38] sm:$0xff]
        %v295 = vld [vmem:[%s205 + $0x40] sm:$0xff]
        %v296 = vld [vmem:[%s205 + $0x48] sm:$0xff]
        %v297 = vld [vmem:[%s205 + $0x50] sm:$0xff]
        %v298 = vld [vmem:[%s205 + $0x58] sm:$0xff]
        %v299 = vld [vmem:[%s205 + $0x60] sm:$0xff]
        %v300 = vld [vmem:[%s205 + $0x68] sm:$0xff]
        %v301 = vld [vmem:[%s205 + $0x70] sm:$0xff]
        %v302 = vld [vmem:[%s205 + $0x78] sm:$0xff]
        %v303 = vld [vmem:[%s205 + $0x80] sm:$0xff]
        %v304 = vld [vmem:[%s205 + $0x88] sm:$0xff]
        %v305 = vld [vmem:[%s205 + $0x90] sm:$0xff]
        %v306 = vld [vmem:[%s205 + $0x98] sm:$0xff]
        %v307 = vld [vmem:[%s205 + $0xa0] sm:$0xff]
        %v308 = vld [vmem:[%s205 + $0xa8] sm:$0xff]
        %v309 = vld [vmem:[%s205 + $0xb0] sm:$0xff]
        %v310 = vld [vmem:[%s205 + $0xb8] sm:$0xff]
        %v311 = vld [vmem:[%s205 + $0xc0] sm:$0xff]
        %v312 = vld [vmem:[%s205 + $0xc8] sm:$0xff]
        %v313 = vld [vmem:[%s205 + $0xd0] sm:$0xff]
        %v314 = vld [vmem:[%s205 + $0xd8] sm:$0xff]
        %v315 = vld [vmem:[%s205 + $0xe0] sm:$0xff]
        %v316 = vld [vmem:[%s205 + $0xe8] sm:$0xff]
        %v317 = vld [vmem:[%s205 + $0xf0] sm:$0xff]
        %v318 = vld [vmem:[%s205 + $0xf8] sm:$0xff]
        %v319 = vld [vmem:[%s215] sm:$0xf]
        %v320 = vld [vmem:[%s215 + $0x4] sm:$0xf]
        %v321 = vld [vmem:[%s215 + $0x8] sm:$0xf]
        %v322 = vld [vmem:[%s215 + $0xc] sm:$0xf]
        %v323 = vld [vmem:[%s215 + $0x10] sm:$0xf]
        %v324 = vld [vmem:[%s215 + $0x14] sm:$0xf]
        %v325 = vld [vmem:[%s215 + $0x18] sm:$0xf]
        %v326 = vld [vmem:[%s215 + $0x1c] sm:$0xf]
        %v327 = vld [vmem:[%s215 + $0x20] sm:$0xf]
        %v328 = vld [vmem:[%s215 + $0x24] sm:$0xf]
        %v329 = vld [vmem:[%s215 + $0x28] sm:$0xf]
        %v330 = vld [vmem:[%s215 + $0x2c] sm:$0xf]
        %v331 = vld [vmem:[%s215 + $0x30] sm:$0xf]
        %v332 = vld [vmem:[%s215 + $0x34] sm:$0xf]
        %v333 = vld [vmem:[%s215 + $0x38] sm:$0xf]
        %v334 = vld [vmem:[%s215 + $0x3c] sm:$0xf]
        %v335 = vld [vmem:[%s215 + $0x40] sm:$0xf]
        %v336 = vld [vmem:[%s215 + $0x44] sm:$0xf]
        %v337 = vld [vmem:[%s215 + $0x48] sm:$0xf]
        %v338 = vld [vmem:[%s215 + $0x4c] sm:$0xf]
        %v339 = vld [vmem:[%s215 + $0x50] sm:$0xf]
        %v340 = vld [vmem:[%s215 + $0x54] sm:$0xf]
        %v341 = vld [vmem:[%s215 + $0x58] sm:$0xf]
        %v342 = vld [vmem:[%s215 + $0x5c] sm:$0xf]
        %v343 = vld [vmem:[%s215 + $0x60] sm:$0xf]
        %v344 = vld [vmem:[%s215 + $0x64] sm:$0xf]
        %v345 = vld [vmem:[%s215 + $0x68] sm:$0xf]
        %v346 = vld [vmem:[%s215 + $0x6c] sm:$0xf]
        %v347 = vld [vmem:[%s215 + $0x70] sm:$0xf]
        %v348 = vld [vmem:[%s215 + $0x74] sm:$0xf]
        %v349 = vld [vmem:[%s215 + $0x78] sm:$0xf]
        %v350 = vld [vmem:[%s215 + $0x7c] sm:$0xf]
        %v383 = vunpack.c.l.b16 %v287
        %v384 = vunpack.c.h.b16 %v287
        %v385 = vunpack.c.l.b16 %v288
        %v386 = vunpack.c.h.b16 %v288
        %v387 = vunpack.c.l.b16 %v289
        %v388 = vunpack.c.h.b16 %v289
        %v389 = vunpack.c.l.b16 %v290
        %v390 = vunpack.c.h.b16 %v290
        %v391 = vunpack.c.l.b16 %v291
        %v392 = vunpack.c.h.b16 %v291
        %v393 = vunpack.c.l.b16 %v292
        %v394 = vunpack.c.h.b16 %v292
        %v395 = vunpack.c.l.b16 %v293
        %v396 = vunpack.c.h.b16 %v293
        %v397 = vunpack.c.l.b16 %v294
        %v398 = vunpack.c.h.b16 %v294
        %v399 = vunpack.c.l.b16 %v295
        %v400 = vunpack.c.h.b16 %v295
        %v401 = vunpack.c.l.b16 %v296
        %v402 = vunpack.c.h.b16 %v296
        %v403 = vunpack.c.l.b16 %v297
        %v404 = vunpack.c.h.b16 %v297
        %v405 = vunpack.c.l.b16 %v298
        %v406 = vunpack.c.h.b16 %v298
        %v407 = vunpack.c.l.b16 %v299
        %v408 = vunpack.c.h.b16 %v299
        %v409 = vunpack.c.l.b16 %v300
        %v410 = vunpack.c.h.b16 %v300
        %v411 = vunpack.c.l.b16 %v301
        %v412 = vunpack.c.h.b16 %v301
        %v413 = vunpack.c.l.b16 %v302
        %v414 = vunpack.c.h.b16 %v302
        %v415 = vunpack.c.l.b16 %v303
        %v416 = vunpack.c.h.b16 %v303
        %v417 = vunpack.c.l.b16 %v304
        %v418 = vunpack.c.h.b16 %v304
        %v419 = vunpack.c.l.b16 %v305
        %v420 = vunpack.c.h.b16 %v305
        %v421 = vunpack.c.l.b16 %v306
        %v422 = vunpack.c.h.b16 %v306
        %v423 = vunpack.c.l.b16 %v307
        %v424 = vunpack.c.h.b16 %v307
        %v425 = vunpack.c.l.b16 %v308
        %v426 = vunpack.c.h.b16 %v308
        %v427 = vunpack.c.l.b16 %v309
        %v428 = vunpack.c.h.b16 %v309
        %v429 = vunpack.c.l.b16 %v310
        %v430 = vunpack.c.h.b16 %v310
        %v431 = vunpack.c.l.b16 %v311
        %v432 = vunpack.c.h.b16 %v311
        %v433 = vunpack.c.l.b16 %v312
        %v434 = vunpack.c.h.b16 %v312
        %v435 = vunpack.c.l.b16 %v313
        %v436 = vunpack.c.h.b16 %v313
        %v437 = vunpack.c.l.b16 %v314
        %v438 = vunpack.c.h.b16 %v314
        %v439 = vunpack.c.l.b16 %v315
        %v440 = vunpack.c.h.b16 %v315
        %v441 = vunpack.c.l.b16 %v316
        %v442 = vunpack.c.h.b16 %v316
        %v443 = vunpack.c.l.b16 %v317
        %v444 = vunpack.c.h.b16 %v317
        %v445 = vunpack.c.l.b16 %v318
        %v446 = vunpack.c.h.b16 %v318
        %v447 = vpack.c.b16 %v385, %v383
        %v448 = vpack.c.b16 %v386, %v384
        %v449 = vpack.c.b16 %v389, %v387
        %v450 = vpack.c.b16 %v390, %v388
        %v451 = vpack.c.b16 %v393, %v391
        %v452 = vpack.c.b16 %v394, %v392
        %v453 = vpack.c.b16 %v397, %v395
        %v454 = vpack.c.b16 %v398, %v396
        %v455 = vpack.c.b16 %v401, %v399
        %v456 = vpack.c.b16 %v402, %v400
        %v457 = vpack.c.b16 %v405, %v403
        %v458 = vpack.c.b16 %v406, %v404
        %v459 = vpack.c.b16 %v409, %v407
        %v460 = vpack.c.b16 %v410, %v408
        %v461 = vpack.c.b16 %v413, %v411
        %v462 = vpack.c.b16 %v414, %v412
        %v463 = vpack.c.b16 %v417, %v415
        %v464 = vpack.c.b16 %v418, %v416
        %v465 = vpack.c.b16 %v421, %v419
        %v466 = vpack.c.b16 %v422, %v420
        %v467 = vpack.c.b16 %v425, %v423
        %v468 = vpack.c.b16 %v426, %v424
        %v469 = vpack.c.b16 %v429, %v427
        %v470 = vpack.c.b16 %v430, %v428
        %v471 = vpack.c.b16 %v433, %v431
        %v472 = vpack.c.b16 %v434, %v432
        %v473 = vpack.c.b16 %v437, %v435
        %v474 = vpack.c.b16 %v438, %v436
        %v475 = vpack.c.b16 %v441, %v439
        %v476 = vpack.c.b16 %v442, %v440
        %v477 = vpack.c.b16 %v445, %v443
        %v478 = vpack.c.b16 %v446, %v444
        %v543 = vunpack.c.l.b16 %v319
        %v544 = vunpack.c.l.b16 %v320
        %v545 = vunpack.c.l.b16 %v321
        %v546 = vunpack.c.l.b16 %v322
        %v547 = vunpack.c.l.b16 %v323
        %v548 = vunpack.c.l.b16 %v324
        %v549 = vunpack.c.l.b16 %v325
        %v550 = vunpack.c.l.b16 %v326
        %v551 = vunpack.c.l.b16 %v327
        %v552 = vunpack.c.l.b16 %v328
        %v553 = vunpack.c.l.b16 %v329
        %v554 = vunpack.c.l.b16 %v330
        %v555 = vunpack.c.l.b16 %v331
        %v556 = vunpack.c.l.b16 %v332
        %v557 = vunpack.c.l.b16 %v333
        %v558 = vunpack.c.l.b16 %v334
        %v559 = vunpack.c.l.b16 %v335
        %v560 = vunpack.c.l.b16 %v336
        %v561 = vunpack.c.l.b16 %v337
        %v562 = vunpack.c.l.b16 %v338
        %v563 = vunpack.c.l.b16 %v339
        %v564 = vunpack.c.l.b16 %v340
        %v565 = vunpack.c.l.b16 %v341
        %v566 = vunpack.c.l.b16 %v342
        %v567 = vunpack.c.l.b16 %v343
        %v568 = vunpack.c.l.b16 %v344
        %v569 = vunpack.c.l.b16 %v345
        %v570 = vunpack.c.l.b16 %v346
        %v571 = vunpack.c.l.b16 %v347
        %v572 = vunpack.c.l.b16 %v348
        %v573 = vunpack.c.l.b16 %v349
        %v574 = vunpack.c.l.b16 %v350
        %v575 = vpack.c.b16 %v544, %v543
        %v576 = vpack.c.b16 %v546, %v545
        %v577 = vpack.c.b16 %v548, %v547
        %v578 = vpack.c.b16 %v550, %v549
        %v579 = vpack.c.b16 %v552, %v551
        %v580 = vpack.c.b16 %v554, %v553
        %v581 = vpack.c.b16 %v556, %v555
        %v582 = vpack.c.b16 %v558, %v557
        %v583 = vpack.c.b16 %v560, %v559
        %v584 = vpack.c.b16 %v562, %v561
        %v585 = vpack.c.b16 %v564, %v563
        %v586 = vpack.c.b16 %v566, %v565
        %v587 = vpack.c.b16 %v568, %v567
        %v588 = vpack.c.b16 %v570, %v569
        %v589 = vpack.c.b16 %v572, %v571
        %v590 = vpack.c.b16 %v574, %v573
        %607 = vmatprep.subr.bf16.mxu0 0
        %608 = vmatpush1.bf16.msra.mxu0 %v575
        %609 = vmatprep.subr.bf16.mxu0 0
        %610 = vmatpush1.bf16.msra.mxu0 %v576
        %611 = vmatprep.subr.bf16.mxu0 0
        %612 = vmatpush1.bf16.msra.mxu0 %v577
        %613 = vmatprep.subr.bf16.mxu0 0
        %614 = vmatpush1.bf16.msra.mxu0 %v578
        %615 = vmatprep.subr.bf16.mxu0 0
        %616 = vmatpush1.bf16.msra.mxu0 %v579
        %617 = vmatprep.subr.bf16.mxu0 0
        %618 = vmatpush1.bf16.msra.mxu0 %v580
        %619 = vmatprep.subr.bf16.mxu0 0
        %620 = vmatpush1.bf16.msra.mxu0 %v581
        %621 = vmatprep.subr.bf16.mxu0 0
        %622 = vmatpush1.bf16.msra.mxu0 %v582
        %623 = vmatprep.subr.bf16.mxu0 0
        %624 = vmatpush1.bf16.msra.mxu0 %v583
        %625 = vmatprep.subr.bf16.mxu0 0
        %626 = vmatpush1.bf16.msra.mxu0 %v584
        %627 = vmatprep.subr.bf16.mxu0 0
        %628 = vmatpush1.bf16.msra.mxu0 %v585
        %629 = vmatprep.subr.bf16.mxu0 0
        %630 = vmatpush1.bf16.msra.mxu0 %v586
        %631 = vmatprep.subr.bf16.mxu0 0
        %632 = vmatpush1.bf16.msra.mxu0 %v587
        %633 = vmatprep.subr.bf16.mxu0 0
        %634 = vmatpush1.bf16.msra.mxu0 %v588
        %635 = vmatprep.subr.bf16.mxu0 0
        %636 = vmatpush1.bf16.msra.mxu0 %v589
        %637 = vmatprep.subr.bf16.mxu0 0
        %638 = vmatpush1.bf16.msra.mxu0 %v590
        %639 = vmatprep.mubr.bf16.mxu0 %v448
        %640 = vmatmul.mubr.bf16.gmra.mrb[0].mxu0 %v447
        %v641 = vpop.f32.mrb[0].mxu0
        %v642 = vadd.f32 0.0, %v641
        %v643 = vpop.f32.mrb[0].mxu0
        %v644 = vpop.f32.mrb[0].mxu0
        %v645 = vadd.f32 0.0, %v644
        %v646 = vpop.f32.mrb[0].mxu0
        %647 = vmatprep.mubr.bf16.mxu0 %v450
        %648 = vmatmul.mubr.bf16.gmra.mrb[0].mxu0 %v449
        %v649 = vpop.f32.mrb[0].mxu0
        %v650 = vadd.f32 0.0, %v649
        %v651 = vpop.f32.mrb[0].mxu0
        %v652 = vpop.f32.mrb[0].mxu0
        %v653 = vadd.f32 0.0, %v652
        %v654 = vpop.f32.mrb[0].mxu0
        %655 = vmatprep.mubr.bf16.mxu0 %v452
        %656 = vmatmul.mubr.bf16.gmra.mrb[0].mxu0 %v451
        %v657 = vpop.f32.mrb[0].mxu0
        %v658 = vadd.f32 0.0, %v657
        %v659 = vpop.f32.mrb[0].mxu0
        %v660 = vpop.f32.mrb[0].mxu0
        %v661 = vadd.f32 0.0, %v660
        %v662 = vpop.f32.mrb[0].mxu0
        %663 = vmatprep.mubr.bf16.mxu0 %v454
        %664 = vmatmul.mubr.bf16.gmra.mrb[0].mxu0 %v453
        %v665 = vpop.f32.mrb[0].mxu0
        %v666 = vadd.f32 0.0, %v665
        %v667 = vpop.f32.mrb[0].mxu0
        %v668 = vpop.f32.mrb[0].mxu0
        %v669 = vadd.f32 0.0, %v668
        %v670 = vpop.f32.mrb[0].mxu0
        %671 = vmatprep.mubr.bf16.mxu0 %v456
        %672 = vmatmul.mubr.bf16.gmra.mrb[0].mxu0 %v455
        %v673 = vpop.f32.mrb[0].mxu0
        %v674 = vadd.f32 0.0, %v673
        %v675 = vpop.f32.mrb[0].mxu0
        %v676 = vpop.f32.mrb[0].mxu0
        %v677 = vadd.f32 0.0, %v676
        %v678 = vpop.f32.mrb[0].mxu0
        %679 = vmatprep.mubr.bf16.mxu0 %v458
        %680 = vmatmul.mubr.bf16.gmra.mrb[0].mxu0 %v457
        %v681 = vpop.f32.mrb[0].mxu0
        %v682 = vadd.f32 0.0, %v681
        %v683 = vpop.f32.mrb[0].mxu0
        %v684 = vpop.f32.mrb[0].mxu0
        %v685 = vadd.f32 0.0, %v684
        %v686 = vpop.f32.mrb[0].mxu0
        %687 = vmatprep.mubr.bf16.mxu0 %v460
        %688 = vmatmul.mubr.bf16.gmra.mrb[0].mxu0 %v459
        %v689 = vpop.f32.mrb[0].mxu0
        %v690 = vadd.f32 0.0, %v689
        %v691 = vpop.f32.mrb[0].mxu0
        %v692 = vpop.f32.mrb[0].mxu0
        %v693 = vadd.f32 0.0, %v692
        %v694 = vpop.f32.mrb[0].mxu0
        %695 = vmatprep.mubr.bf16.mxu0 %v462
        %696 = vmatmul.mubr.bf16.gmra.mrb[0].mxu0 %v461
        %v697 = vpop.f32.mrb[0].mxu0
        %v698 = vadd.f32 0.0, %v697
        %v699 = vpop.f32.mrb[0].mxu0
        %v700 = vpop.f32.mrb[0].mxu0
        %v701 = vadd.f32 0.0, %v700
        %v702 = vpop.f32.mrb[0].mxu0
        %703 = vmatprep.mubr.bf16.mxu0 %v464
        %704 = vmatmul.mubr.bf16.gmra.mrb[0].mxu0 %v463
        %v705 = vpop.f32.mrb[0].mxu0
        %v706 = vadd.f32 0.0, %v705
        %v707 = vpop.f32.mrb[0].mxu0
        %v708 = vpop.f32.mrb[0].mxu0
        %v709 = vadd.f32 0.0, %v708
        %v710 = vpop.f32.mrb[0].mxu0
        %711 = vmatprep.mubr.bf16.mxu0 %v466
        %712 = vmatmul.mubr.bf16.gmra.mrb[0].mxu0 %v465
        %v713 = vpop.f32.mrb[0].mxu0
        %v714 = vadd.f32 0.0, %v713
        %v715 = vpop.f32.mrb[0].mxu0
        %v716 = vpop.f32.mrb[0].mxu0
        %v717 = vadd.f32 0.0, %v716
        %v718 = vpop.f32.mrb[0].mxu0
        %719 = vmatprep.mubr.bf16.mxu0 %v468
        %720 = vmatmul.mubr.bf16.gmra.mrb[0].mxu0 %v467
        %v721 = vpop.f32.mrb[0].mxu0
        %v722 = vadd.f32 0.0, %v721
        %v723 = vpop.f32.mrb[0].mxu0
        %v724 = vpop.f32.mrb[0].mxu0
        %v725 = vadd.f32 0.0, %v724
        %v726 = vpop.f32.mrb[0].mxu0
        %727 = vmatprep.mubr.bf16.mxu0 %v470
        %728 = vmatmul.mubr.bf16.gmra.mrb[0].mxu0 %v469
        %v729 = vpop.f32.mrb[0].mxu0
        %v730 = vadd.f32 0.0, %v729
        %v731 = vpop.f32.mrb[0].mxu0
        %v732 = vpop.f32.mrb[0].mxu0
        %v733 = vadd.f32 0.0, %v732
        %v734 = vpop.f32.mrb[0].mxu0
        %735 = vmatprep.mubr.bf16.mxu0 %v472
        %736 = vmatmul.mubr.bf16.gmra.mrb[0].mxu0 %v471
        %v737 = vpop.f32.mrb[0].mxu0
        %v738 = vadd.f32 0.0, %v737
        %v739 = vpop.f32.mrb[0].mxu0
        %v740 = vpop.f32.mrb[0].mxu0
        %v741 = vadd.f32 0.0, %v740
        %v742 = vpop.f32.mrb[0].mxu0
        %743 = vmatprep.mubr.bf16.mxu0 %v474
        %744 = vmatmul.mubr.bf16.gmra.mrb[0].mxu0 %v473
        %v745 = vpop.f32.mrb[0].mxu0
        %v746 = vadd.f32 0.0, %v745
        %v747 = vpop.f32.mrb[0].mxu0
        %v748 = vpop.f32.mrb[0].mxu0
        %v749 = vadd.f32 0.0, %v748
        %v750 = vpop.f32.mrb[0].mxu0
        %751 = vmatprep.mubr.bf16.mxu0 %v476
        %752 = vmatmul.mubr.bf16.gmra.mrb[0].mxu0 %v475
        %v753 = vpop.f32.mrb[0].mxu0
        %v754 = vadd.f32 0.0, %v753
        %v755 = vpop.f32.mrb[0].mxu0
        %v756 = vpop.f32.mrb[0].mxu0
        %v757 = vadd.f32 0.0, %v756
        %v758 = vpop.f32.mrb[0].mxu0
        %759 = vmatprep.mubr.bf16.mxu0 %v478
        %760 = vmatmul.mubr.bf16.gmra.mrb[0].mxu0 %v477
        %v761 = vpop.f32.mrb[0].mxu0
        %v762 = vadd.f32 0.0, %v761
        %v763 = vpop.f32.mrb[0].mxu0
        %v764 = vpop.f32.mrb[0].mxu0
        %v765 = vadd.f32 0.0, %v764
        %v766 = vpop.f32.mrb[0].mxu0
        %767 = vdwg.mxu0
        %v768 = vadd.f32 %v255, %v642
        %v769 = vadd.f32 %v256, %v645
        %v770 = vadd.f32 %v257, %v650
        %v771 = vadd.f32 %v258, %v653
        %v772 = vadd.f32 %v259, %v658
        %v773 = vadd.f32 %v260, %v661
        %v774 = vadd.f32 %v261, %v666
        %v775 = vadd.f32 %v262, %v669
        %v776 = vadd.f32 %v263, %v674
        %v777 = vadd.f32 %v264, %v677
        %v778 = vadd.f32 %v265, %v682
        %v779 = vadd.f32 %v266, %v685
        %v780 = vadd.f32 %v267, %v690
        %v781 = vadd.f32 %v268, %v693
        %v782 = vadd.f32 %v269, %v698
        %v783 = vadd.f32 %v270, %v701
        %v784 = vadd.f32 %v271, %v706
        %v785 = vadd.f32 %v272, %v709
        %v786 = vadd.f32 %v273, %v714
        %v787 = vadd.f32 %v274, %v717
        %v788 = vadd.f32 %v275, %v722
        %v789 = vadd.f32 %v276, %v725
        %v790 = vadd.f32 %v277, %v730
        %v791 = vadd.f32 %v278, %v733
        %v792 = vadd.f32 %v279, %v738
        %v793 = vadd.f32 %v280, %v741
        %v794 = vadd.f32 %v281, %v746
        %v795 = vadd.f32 %v282, %v749
        %v796 = vadd.f32 %v283, %v754
        %v797 = vadd.f32 %v284, %v757
        %v798 = vadd.f32 %v285, %v762
        %v799 = vadd.f32 %v286, %v765
        %800 = vst [vmem:[#allocation2] sm:$0xff] %v768
        %801 = vst [vmem:[#allocation2 + $0x8] sm:$0xff] %v769
        %802 = vst [vmem:[#allocation2 + $0x10] sm:$0xff] %v770
        %803 = vst [vmem:[#allocation2 + $0x18] sm:$0xff] %v771
        %804 = vst [vmem:[#allocation2 + $0x20] sm:$0xff] %v772
        %805 = vst [vmem:[#allocation2 + $0x28] sm:$0xff] %v773
        %806 = vst [vmem:[#allocation2 + $0x30] sm:$0xff] %v774
        %807 = vst [vmem:[#allocation2 + $0x38] sm:$0xff] %v775
        %808 = vst [vmem:[#allocation2 + $0x40] sm:$0xff] %v776
        %809 = vst [vmem:[#allocation2 + $0x48] sm:$0xff] %v777
        %810 = vst [vmem:[#allocation2 + $0x50] sm:$0xff] %v778
        %811 = vst [vmem:[#allocation2 + $0x58] sm:$0xff] %v779
        %812 = vst [vmem:[#allocation2 + $0x60] sm:$0xff] %v780
        %813 = vst [vmem:[#allocation2 + $0x68] sm:$0xff] %v781
        %814 = vst [vmem:[#allocation2 + $0x70] sm:$0xff] %v782
        %815 = vst [vmem:[#allocation2 + $0x78] sm:$0xff] %v783
        %816 = vst [vmem:[#allocation2 + $0x80] sm:$0xff] %v784
        %817 = vst [vmem:[#allocation2 + $0x88] sm:$0xff] %v785
        %818 = vst [vmem:[#allocation2 + $0x90] sm:$0xff] %v786
        %819 = vst [vmem:[#allocation2 + $0x98] sm:$0xff] %v787
        %820 = vst [vmem:[#allocation2 + $0xa0] sm:$0xff] %v788
        %821 = vst [vmem:[#allocation2 + $0xa8] sm:$0xff] %v789
        %822 = vst [vmem:[#allocation2 + $0xb0] sm:$0xff] %v790
        %823 = vst [vmem:[#allocation2 + $0xb8] sm:$0xff] %v791
        %824 = vst [vmem:[#allocation2 + $0xc0] sm:$0xff] %v792
        %825 = vst [vmem:[#allocation2 + $0xc8] sm:$0xff] %v793
        %826 = vst [vmem:[#allocation2 + $0xd0] sm:$0xff] %v794
        %827 = vst [vmem:[#allocation2 + $0xd8] sm:$0xff] %v795
        %828 = vst [vmem:[#allocation2 + $0xe0] sm:$0xff] %v796
        %829 = vst [vmem:[#allocation2 + $0xe8] sm:$0xff] %v797
        %830 = vst [vmem:[#allocation2 + $0xf0] sm:$0xff] %v798
        %831 = vst [vmem:[#allocation2 + $0xf8] sm:$0xff] %v799
        // Predicated region
        $region33: #{conv2d_kxk.1} parent=27 // pred_check
          %p832 = pneg %p219
        $region34: #{conv2d_kxk.1} parent=27 // pred_check_branch
          %834 = sbr.rel (%p832) target = $region36
        $region35: #{conv2d_kxk.1} parent=27 // pred_region
          %v835 = vld [vmem:[#allocation2] sm:$0xff]
          %v836 = vld [vmem:[#allocation2 + $0x8] sm:$0xff]
          %v837 = vld [vmem:[#allocation2 + $0x10] sm:$0xff]
          %v838 = vld [vmem:[#allocation2 + $0x18] sm:$0xff]
          %v839 = vld [vmem:[#allocation2 + $0x20] sm:$0xff]
          %v840 = vld [vmem:[#allocation2 + $0x28] sm:$0xff]
          %v841 = vld [vmem:[#allocation2 + $0x30] sm:$0xff]
          %v842 = vld [vmem:[#allocation2 + $0x38] sm:$0xff]
          %v843 = vld [vmem:[#allocation2 + $0x40] sm:$0xff]
          %v844 = vld [vmem:[#allocation2 + $0x48] sm:$0xff]
          %v845 = vld [vmem:[#allocation2 + $0x50] sm:$0xff]
          %v846 = vld [vmem:[#allocation2 + $0x58] sm:$0xff]
          %v847 = vld [vmem:[#allocation2 + $0x60] sm:$0xff]
          %v848 = vld [vmem:[#allocation2 + $0x68] sm:$0xff]
          %v849 = vld [vmem:[#allocation2 + $0x70] sm:$0xff]
          %v850 = vld [vmem:[#allocation2 + $0x78] sm:$0xff]
          %v851 = vld [vmem:[#allocation2 + $0x80] sm:$0xff]
          %v852 = vld [vmem:[#allocation2 + $0x88] sm:$0xff]
          %v853 = vld [vmem:[#allocation2 + $0x90] sm:$0xff]
          %v854 = vld [vmem:[#allocation2 + $0x98] sm:$0xff]
          %v855 = vld [vmem:[#allocation2 + $0xa0] sm:$0xff]
          %v856 = vld [vmem:[#allocation2 + $0xa8] sm:$0xff]
          %v857 = vld [vmem:[#allocation2 + $0xb0] sm:$0xff]
          %v858 = vld [vmem:[#allocation2 + $0xb8] sm:$0xff]
          %v859 = vld [vmem:[#allocation2 + $0xc0] sm:$0xff]
          %v860 = vld [vmem:[#allocation2 + $0xc8] sm:$0xff]
          %v861 = vld [vmem:[#allocation2 + $0xd0] sm:$0xff]
          %v862 = vld [vmem:[#allocation2 + $0xd8] sm:$0xff]
          %v863 = vld [vmem:[#allocation2 + $0xe0] sm:$0xff]
          %v864 = vld [vmem:[#allocation2 + $0xe8] sm:$0xff]
          %v865 = vld [vmem:[#allocation2 + $0xf0] sm:$0xff]
          %v866 = vld [vmem:[#allocation2 + $0xf8] sm:$0xff]
          %v867 = vpack.c.bf16 %v836, %v835
          %v868 = vpack.c.bf16 %v838, %v837
          %v869 = vpack.c.bf16 %v840, %v839
          %v870 = vpack.c.bf16 %v842, %v841
          %v871 = vpack.c.bf16 %v844, %v843
          %v872 = vpack.c.bf16 %v846, %v845
          %v873 = vpack.c.bf16 %v848, %v847
          %v874 = vpack.c.bf16 %v850, %v849
          %v875 = vpack.c.bf16 %v852, %v851
          %v876 = vpack.c.bf16 %v854, %v853
          %v877 = vpack.c.bf16 %v856, %v855
          %v878 = vpack.c.bf16 %v858, %v857
          %v879 = vpack.c.bf16 %v860, %v859
          %v880 = vpack.c.bf16 %v862, %v861
          %v881 = vpack.c.bf16 %v864, %v863
          %v882 = vpack.c.bf16 %v866, %v865
          %v899 = vunpack.c.l.b16 %v867
          %v900 = vunpack.c.h.b16 %v867
          %v901 = vunpack.c.l.b16 %v868
          %v902 = vunpack.c.h.b16 %v868
          %v903 = vunpack.c.l.b16 %v869
          %v904 = vunpack.c.h.b16 %v869
          %v905 = vunpack.c.l.b16 %v870
          %v906 = vunpack.c.h.b16 %v870
          %v907 = vunpack.c.l.b16 %v871
          %v908 = vunpack.c.h.b16 %v871
          %v909 = vunpack.c.l.b16 %v872
          %v910 = vunpack.c.h.b16 %v872
          %v911 = vunpack.c.l.b16 %v873
          %v912 = vunpack.c.h.b16 %v873
          %v913 = vunpack.c.l.b16 %v874
          %v914 = vunpack.c.h.b16 %v874
          %v915 = vunpack.c.l.b16 %v875
          %v916 = vunpack.c.h.b16 %v875
          %v917 = vunpack.c.l.b16 %v876
          %v918 = vunpack.c.h.b16 %v876
          %v919 = vunpack.c.l.b16 %v877
          %v920 = vunpack.c.h.b16 %v877
          %v921 = vunpack.c.l.b16 %v878
          %v922 = vunpack.c.h.b16 %v878
          %v923 = vunpack.c.l.b16 %v879
          %v924 = vunpack.c.h.b16 %v879
          %v925 = vunpack.c.l.b16 %v880
          %v926 = vunpack.c.h.b16 %v880
          %v927 = vunpack.c.l.b16 %v881
          %v928 = vunpack.c.h.b16 %v881
          %v929 = vunpack.c.l.b16 %v882
          %v930 = vunpack.c.h.b16 %v882
          %v931 = vpack.c.b16 %v899, %v899
          %v932 = vpack.c.b16 %v900, %v900
          %v933 = vpack.c.b16 %v901, %v901
          %v934 = vpack.c.b16 %v902, %v902
          %v935 = vpack.c.b16 %v903, %v903
          %v936 = vpack.c.b16 %v904, %v904
          %v937 = vpack.c.b16 %v905, %v905
          %v938 = vpack.c.b16 %v906, %v906
          %v939 = vpack.c.b16 %v907, %v907
          %v940 = vpack.c.b16 %v908, %v908
          %v941 = vpack.c.b16 %v909, %v909
          %v942 = vpack.c.b16 %v910, %v910
          %v943 = vpack.c.b16 %v911, %v911
          %v944 = vpack.c.b16 %v912, %v912
          %v945 = vpack.c.b16 %v913, %v913
          %v946 = vpack.c.b16 %v914, %v914
          %v947 = vpack.c.b16 %v915, %v915
          %v948 = vpack.c.b16 %v916, %v916
          %v949 = vpack.c.b16 %v917, %v917
          %v950 = vpack.c.b16 %v918, %v918
          %v951 = vpack.c.b16 %v919, %v919
          %v952 = vpack.c.b16 %v920, %v920
          %v953 = vpack.c.b16 %v921, %v921
          %v954 = vpack.c.b16 %v922, %v922
          %v955 = vpack.c.b16 %v923, %v923
          %v956 = vpack.c.b16 %v924, %v924
          %v957 = vpack.c.b16 %v925, %v925
          %v958 = vpack.c.b16 %v926, %v926
          %v959 = vpack.c.b16 %v927, %v927
          %v960 = vpack.c.b16 %v928, %v928
          %v961 = vpack.c.b16 %v929, %v929
          %v962 = vpack.c.b16 %v930, %v930
          %995 = vst [vmem:[%s195] sm:$0xf] %v931
          %996 = vst [vmem:[%s195 + $0x4] sm:$0xf] %v932
          %997 = vst [vmem:[%s195 + $0x8] sm:$0xf] %v933
          %998 = vst [vmem:[%s195 + $0xc] sm:$0xf] %v934
          %999 = vst [vmem:[%s195 + $0x10] sm:$0xf] %v935
          %1000 = vst [vmem:[%s195 + $0x14] sm:$0xf] %v936
          %1001 = vst [vmem:[%s195 + $0x18] sm:$0xf] %v937
          %1002 = vst [vmem:[%s195 + $0x1c] sm:$0xf] %v938
          %1003 = vst [vmem:[%s195 + $0x20] sm:$0xf] %v939
          %1004 = vst [vmem:[%s195 + $0x24] sm:$0xf] %v940
          %1005 = vst [vmem:[%s195 + $0x28] sm:$0xf] %v941
          %1006 = vst [vmem:[%s195 + $0x2c] sm:$0xf] %v942
          %1007 = vst [vmem:[%s195 + $0x30] sm:$0xf] %v943
          %1008 = vst [vmem:[%s195 + $0x34] sm:$0xf] %v944
          %1009 = vst [vmem:[%s195 + $0x38] sm:$0xf] %v945
          %1010 = vst [vmem:[%s195 + $0x3c] sm:$0xf] %v946
          %1011 = vst [vmem:[%s195 + $0x40] sm:$0xf] %v947
          %1012 = vst [vmem:[%s195 + $0x44] sm:$0xf] %v948
          %1013 = vst [vmem:[%s195 + $0x48] sm:$0xf] %v949
          %1014 = vst [vmem:[%s195 + $0x4c] sm:$0xf] %v950
          %1015 = vst [vmem:[%s195 + $0x50] sm:$0xf] %v951
          %1016 = vst [vmem:[%s195 + $0x54] sm:$0xf] %v952
          %1017 = vst [vmem:[%s195 + $0x58] sm:$0xf] %v953
          %1018 = vst [vmem:[%s195 + $0x5c] sm:$0xf] %v954
          %1019 = vst [vmem:[%s195 + $0x60] sm:$0xf] %v955
          %1020 = vst [vmem:[%s195 + $0x64] sm:$0xf] %v956
          %1021 = vst [vmem:[%s195 + $0x68] sm:$0xf] %v957
          %1022 = vst [vmem:[%s195 + $0x6c] sm:$0xf] %v958
          %1023 = vst [vmem:[%s195 + $0x70] sm:$0xf] %v959
          %1024 = vst [vmem:[%s195 + $0x74] sm:$0xf] %v960
          %1025 = vst [vmem:[%s195 + $0x78] sm:$0xf] %v961
          %1026 = vst [vmem:[%s195 + $0x7c] sm:$0xf] %v962
        $region36: #{conv2d_kxk.1} parent=27 // pred_fallthru
          _
        %s1027 = sand.u32 %s101, 1
        %s1028 = scalar_lea.sflag [#allocation4], %s1027
        %s1029 = sand.u32 %s101, 1
        %s1030 = smul.addr %s1029, 128
        %s1031 = scalar_lea.vmem [#allocation3], %s1030
        // Predicated region
        $region37: #{conv2d_kxk.1} parent=27 // pred_check
          %p1032 = pneg %p111
        $region38: #{conv2d_kxk.1} parent=27 // pred_check_branch
          %1034 = sbr.rel (%p1032) target = $region40
        $region39: #{conv2d_kxk.1} parent=27 // pred_region
          %s1035 = smul.u32 32, %s21
          %s1037 = ssub.s32 2048, 2048
          %1038 = vsyncadd %s1028, %s1037
          %s1039 = sadd.s32 %s22, %s1035
          %s1040 = smul.addr %s1039, 64
          %s1041 = scalar_lea.hbm %s2, %s1040
          %s1042 = sshll.u32 %s1031, 4
          %s1043 = int_to_ptr.vmem [resolvable:$true] %s1042
          %1048 = dma.vmem_to_hbm [thread:$0]  %s1043, 2048, %s1041, %s1028, 64, 64, 4
        $region40: #{conv2d_kxk.1} parent=27 // pred_fallthru
          _
      $region28: #{conv2d_kxk.1} parent=5 // pred_fallthru
        _
      %p1049 = scmp.le.s32.totalorder 2, %s11
      // Predicated region
      $region41: #{conv2d_kxk.1} parent=5 // pred_check
        %p1050 = pneg %p1049
      $region42: #{conv2d_kxk.1} parent=5 // pred_check_branch
        %1052 = sbr.rel (%p1050) target = $region44
      $region43: #{conv2d_kxk.1} parent=5 // pred_region
        %s1053 = ssub.s32 %s11, 2
        // Predicated region
        $region45: #{conv2d_kxk.1} parent=43 // pred_check
          %p1054 = pneg %p117
        $region46: #{conv2d_kxk.1} parent=43 // pred_check_branch
          %1056 = sbr.rel (%p1054) target = $region48
        $region47: #{conv2d_kxk.1} parent=43 // pred_region
          %s1057 = sand.u32 %s102, 1
          %s1058 = scalar_lea.sflag [#allocation4], %s1057
          %s1059 = sand.u32 %s102, 1
          %s1060 = smul.addr %s1059, 128
          %s1061 = scalar_lea.vmem [#allocation3], %s1060
          %1062 = dma.done %s1058, 2048
        $region48: #{conv2d_kxk.1} parent=43 // pred_fallthru
          _
      $region44: #{conv2d_kxk.1} parent=5 // pred_fallthru
        _
    $region6: #{conv2d_kxk.1} parent=1 // loop_footer
      %s15 = sadd.s32 1, %s11
    $region7: #{conv2d_kxk.1} parent=1 // loop_footer_branch
      %10 = sbr.rel target = $region3
    $region8: #{conv2d_kxk.1} parent=1 // loop_exit
      _
    %1063 = vsyncpa [#allocation4], 1
    %s1064 = scalar_lea.sflag [#allocation4], 1
    %1065 = vsyncpa %s1064, 1

</llo_original>
